<compile_context>
chip_gen: v7x
topology: tpu7x:2x2x1
jax: 0.10.0
libtpu: 0.0.40
codegen_flags: <defaults>
</compile_context>

<pallas_src>
import jax
import jax.numpy as jnp
from jax import lax
from jax.experimental import pallas as pl
from jax.experimental.pallas import tpu as pltpu


def _round_down(x, m):
    return (x // m) * m


def _vmem_capacity_bytes():
    """Best-effort query of per-core VMEM; conservative fallback (v7x = 64 MiB)."""
    try:
        info = pltpu.get_tpu_info()
        cap = getattr(info, "vmem_capacity_bytes", None)
        if cap:
            return int(cap)
    except Exception:
        pass
    return 64 * 2 ** 20


def _make_kernel(seq_tile, seq_len):
    """Builds the per-tile kernel; ragged-tail masking is compiled in only if needed."""
    ragged = (seq_len % seq_tile) != 0

    def kernel(mask_ref, feat_ref, inv_len_ref, out_ref, acc_ref):
        s = pl.program_id(1)

        @pl.when(s == 0)
        def _init():
            acc_ref[...] = jnp.zeros_like(acc_ref)

        mask = mask_ref[...]        # (TB, 1, TS)  in features.dtype
        feat = feat_ref[...]        # (TB, TS, H)

        if ragged:
            # Positions >= seq_len come from an out-of-bounds block read and hold
            # unspecified data; use select (not multiply) so inf/NaN garbage can
            # never reach the MXU accumulation.
            base = s * seq_tile
            col = base + lax.broadcasted_iota(jnp.int32, mask.shape, 2)
            mask = jnp.where(col < seq_len, mask, jnp.zeros_like(mask))
            row = base + lax.broadcasted_iota(
                jnp.int32, (feat.shape[0], feat.shape[1], 1), 1)
            feat = jnp.where(row < seq_len, feat, jnp.zeros_like(feat))

        # Batched MXU contraction over the sequence tile: (1, TS) @ (TS, H) per
        # batch row, accumulated in f32. Mirrors the flash-attention 'bqk,bkd->bqd'
        # pattern (q == 1), so no relayouts and no big f32 temporaries.
        acc_ref[...] += lax.dot_general(
            mask, feat,
            dimension_numbers=(((2,), (1,)), ((0,), (0,))),
            preferred_element_type=jnp.float32)

        @pl.when(s == pl.num_programs(1) - 1)
        def _finalize():
            out_ref[...] = (acc_ref[...] * inv_len_ref[...]).astype(out_ref.dtype)

    return kernel


def gen_repr(features, input_mask, *, batch_tile=8, max_seq_tile=None):
    """features: (B, S, H) float; input_mask: (B, S) int -> (B, H) masked mean."""
    B, S, H = features.shape
    out_dtype = features.dtype
    itemsize = jnp.dtype(features.dtype).itemsize

    # --- tiny wrapper-side precompute (O(B*S)), exact PyTorch semantics ----------
    length = jnp.sum(input_mask > 0, axis=-1).astype(jnp.float32)          # (B,)
    inv_len = (1.0 / length).reshape(B, 1, 1)                              # (B,1,1)
    # Mask cast once + shaped (B,1,S): directly consumable by the batched MXU dot,
    # no in-kernel casts or rank changes. (Both reshapes are free bitcasts.)
    mask3d = input_mask.astype(features.dtype).reshape(B, 1, S)

    # --- tile selection -----------------------------------------------------------
    # Batch tile: keep >= 2 B-tiles whenever B >= 2 so the "parallel" grid axis can
    # feed both v7x TensorCores; cap at batch_tile for larger B.
    if B >= 2 * batch_tile:
        tb = batch_tile
    elif B >= 2:
        tb = pl.cdiv(B, 2)
    else:
        tb = 1

    # Sequence tile: biggest tile whose (double-buffered) feature block fits a
    # chip-dependent budget; multiples of 128 (512 when large), never below 128.
    vmem_cap = _vmem_capacity_bytes()
    feat_budget = min(16 * 2 ** 20, max(2 * 2 ** 20, vmem_cap // 8))
    ts_budget = max(feat_budget // max(1, tb * H * itemsize), 8)
    if max_seq_tile is not None:
        ts_budget = min(ts_budget, max_seq_tile)
    if S <= ts_budget or S <= 128:
        ts = S                                    # single full-S block (always legal)
    elif ts_budget >= 512:
        ts = _round_down(ts_budget, 512)
    elif ts_budget >= 128:
        ts = _round_down(ts_budget, 128)
    else:
        # TODO(synk): for very large H, add an H grid axis instead of exceeding the
        # per-block budget; ts=128 keeps the (8,128) BlockSpec rule satisfied.
        ts = 128

    grid = (pl.cdiv(B, tb), pl.cdiv(S, ts))

    # --- VMEM limit with headroom (double-buffered inputs/outputs + scratch) -------
    feat_blk = tb * ts * H * itemsize
    mask_blk = tb * 8 * ts * itemsize              # (1,ts) tiles pad to 8 sublanes
    out_blk = tb * 8 * H * jnp.dtype(out_dtype).itemsize
    inv_blk = tb * 8 * 128 * 4
    acc_blk = tb * 8 * H * 4
    working = 2 * (feat_blk + mask_blk + inv_blk + out_blk) + acc_blk
    vmem_limit = int(min(max(2 * working + (4 << 20), 16 << 20), (vmem_cap * 3) // 4))

    cost = pl.CostEstimate(
        flops=2 * B * S * H,
        transcendentals=0,
        bytes_accessed=(features.size * itemsize + mask3d.size * itemsize
                        + B * 4 + B * H * jnp.dtype(out_dtype).itemsize),
    )

    out = pl.pallas_call(
        _make_kernel(ts, S),
        out_shape=jax.ShapeDtypeStruct((B, 1, H), out_dtype),
        grid_spec=pltpu.PrefetchScalarGridSpec(
            num_scalar_prefetch=0,
            grid=grid,
            in_specs=[
                pl.BlockSpec((tb, 1, ts), lambda b, s: (b, 0, s)),   # mask tile
                pl.BlockSpec((tb, ts, H), lambda b, s: (b, s, 0)),   # feature tile
                pl.BlockSpec((tb, 1, 1), lambda b, s: (b, 0, 0)),    # 1/length (resident)
            ],
            out_specs=pl.BlockSpec((tb, 1, H), lambda b, s: (b, 0, 0)),  # resident over S
            scratch_shapes=[pltpu.VMEM((tb, 1, H), jnp.float32)],        # f32 accumulator
        ),
        compiler_params=pltpu.CompilerParams(
            dimension_semantics=("parallel", "arbitrary"),
            vmem_limit_bytes=vmem_limit,
        ),
        cost_estimate=cost,
    )(mask3d, features, inv_len)

    return out.reshape(B, H)


if __name__ == "__main__":
    key = jax.random.PRNGKey(0)

    def reference(features, input_mask):
        tm = input_mask.astype(jnp.float32)
        fsum = jnp.sum(features * tm[:, :, None], axis=-2)
        ln = jnp.sum(input_mask > 0, axis=-1).astype(jnp.float32)
        return fsum / ln[:, None]

    # Case 1: small shapes implied by the module (batch=2, seq=8, hidden=32).
    B, S, H = 2, 8, 32
    k1, k2 = jax.random.split(key)
    features = jax.random.normal(k1, (B, S, H), dtype=jnp.float32)
    lengths = jnp.array([8, 5], dtype=jnp.int32)
    input_mask = (jnp.arange(S)[None, :] < lengths[:, None]).astype(jnp.int32)

    out = jax.block_until_ready(gen_repr(features, input_mask))
    ref = reference(features, input_mask)
    # Tolerances leave margin for MXU matmul precision while still catching real bugs.
    assert jnp.allclose(out, ref, atol=5e-3, rtol=1e-3), "mismatch vs reference (case 1)"

    # Case 2: ragged B and S tails + multi-tile reduction (no feature padding anywhere).
    B2, S2, H2 = 9, 200, 256
    k3, k4 = jax.random.split(k2)
    features2 = jax.random.normal(k3, (B2, S2, H2), dtype=jnp.float32)
    lengths2 = jax.random.randint(k4, (B2,), 1, S2 + 1)
    input_mask2 = (jnp.arange(S2)[None, :] < lengths2[:, None]).astype(jnp.int32)

    out2 = jax.block_until_ready(gen_repr(features2, input_mask2, max_seq_tile=128))
    ref2 = reference(features2, input_mask2)
    assert jnp.allclose(out2, ref2, atol=3e-3, rtol=1e-3), "mismatch vs reference (case 2)"

    print("KERNEL_OK")
</pallas_src>

<mosaic_0001>
module attributes {stable_mosaic.version = 11 : i64} {
  func.func @kernel(%arg0: i32, %arg1: i32, %arg2: memref<1x1x8xf32, #tpu.memory_space<vmem>>, %arg3: memref<1x8x32xf32, #tpu.memory_space<vmem>>, %arg4: memref<1x1x1xf32, #tpu.memory_space<vmem>>, %arg5: memref<1x1x32xf32, #tpu.memory_space<vmem>>, %arg6: memref<1x1x32xf32, #tpu.memory_space<vmem>>) attributes {dimension_semantics = [#tpu.dimension_semantics<parallel>, #tpu.dimension_semantics<arbitrary>], iteration_bounds = array<i64: 2, 1>, scalar_prefetch = 0 : i64, scratch_operands = 1 : i64, tpu.core_type = #tpu.core_type<tc>, window_params = [{transform_indices = @transform_0, window_bounds = array<i64: 1, 1, 8>}, {transform_indices = @transform_1, window_bounds = array<i64: 1, 8, 32>}, {transform_indices = @transform_2, window_bounds = array<i64: 1, 1, 1>}, {transform_indices = @transform_3, window_bounds = array<i64: 1, 1, 32>}]} {
    %c0_i32 = arith.constant 0 : i32
    %0 = arith.cmpi eq, %arg1, %c0_i32 : i32
    %1 = arith.extui %0 : i1 to i32
    %c0_i32_0 = arith.constant 0 : i32
    %2 = arith.cmpi ne, %1, %c0_i32_0 : i32
    scf.if %2 {
      %cst_14 = arith.constant 0.000000e+00 : f32
      %12 = vector.broadcast %cst_14 : f32 to vector<1x1x32xf32>
      %c0_15 = arith.constant 0 : index
      %c0_16 = arith.constant 0 : index
      %c0_17 = arith.constant 0 : index
      %13 = vector.load %arg6[%c0_15, %c0_16, %c0_17] : memref<1x1x32xf32, #tpu.memory_space<vmem>>, vector<1x1x32xf32>
      tpu.vector_store %arg6[%c0_15, %c0_16, %c0_17], %12 {strides = array<i32>} : memref<1x1x32xf32, #tpu.memory_space<vmem>>, vector<1x1x32xf32>,
    } else {
    }
    %c0 = arith.constant 0 : index
    %c0_1 = arith.constant 0 : index
    %c0_2 = arith.constant 0 : index
    %3 = vector.load %arg2[%c0, %c0_1, %c0_2] : memref<1x1x8xf32, #tpu.memory_space<vmem>>, vector<1x1x8xf32>
    %c0_3 = arith.constant 0 : index
    %c0_4 = arith.constant 0 : index
    %c0_5 = arith.constant 0 : index
    %4 = vector.load %arg3[%c0_3, %c0_4, %c0_5] : memref<1x8x32xf32, #tpu.memory_space<vmem>>, vector<1x8x32xf32>
    %c0_6 = arith.constant 0 : index
    %c0_7 = arith.constant 0 : index
    %c0_8 = arith.constant 0 : index
    %5 = vector.load %arg6[%c0_6, %c0_7, %c0_8] : memref<1x1x32xf32, #tpu.memory_space<vmem>>, vector<1x1x32xf32>
    %cst = arith.constant dense<0.000000e+00> : vector<1x1x32xf32>
    %6 = tpu.matmul %3, %4, %cst {dimension_numbers = #tpu.dot_dimension_numbers<[2], [1], [1], [2], [0, 0, 0, 1, 1, 2], [0], [0]>} : vector<1x1x8xf32>, vector<1x8x32xf32>, vector<1x1x32xf32> -> vector<1x1x32xf32>
    %7 = arith.addf %5, %6 : vector<1x1x32xf32>
    %c0_9 = arith.constant 0 : index
    %c0_10 = arith.constant 0 : index
    %c0_11 = arith.constant 0 : index
    %8 = vector.load %arg6[%c0_9, %c0_10, %c0_11] : memref<1x1x32xf32, #tpu.memory_space<vmem>>, vector<1x1x32xf32>
    tpu.vector_store %arg6[%c0_9, %c0_10, %c0_11], %7 {strides = array<i32>} : memref<1x1x32xf32, #tpu.memory_space<vmem>>, vector<1x1x32xf32>,
    %c0_i32_12 = arith.constant 0 : i32
    %9 = arith.cmpi eq, %arg1, %c0_i32_12 : i32
    %10 = arith.extui %9 : i1 to i32
    %c0_i32_13 = arith.constant 0 : i32
    %11 = arith.cmpi ne, %10, %c0_i32_13 : i32
    scf.if %11 {
      %c0_14 = arith.constant 0 : index
      %c0_15 = arith.constant 0 : index
      %c0_16 = arith.constant 0 : index
      %12 = vector.load %arg6[%c0_14, %c0_15, %c0_16] : memref<1x1x32xf32, #tpu.memory_space<vmem>>, vector<1x1x32xf32>
      %c0_17 = arith.constant 0 : index
      %c0_18 = arith.constant 0 : index
      %c0_19 = arith.constant 0 : index
      %13 = vector.load %arg4[%c0_17, %c0_18, %c0_19] : memref<1x1x1xf32, #tpu.memory_space<vmem>>, vector<1x1x1xf32>
      %14 = vector.broadcast %13 : vector<1x1x1xf32> to vector<1x1x32xf32>
      %15 = arith.mulf %12, %14 : vector<1x1x32xf32>
      %c0_20 = arith.constant 0 : index
      %c0_21 = arith.constant 0 : index
      %c0_22 = arith.constant 0 : index
      %16 = vector.load %arg5[%c0_20, %c0_21, %c0_22] : memref<1x1x32xf32, #tpu.memory_space<vmem>>, vector<1x1x32xf32>
      tpu.vector_store %arg5[%c0_20, %c0_21, %c0_22], %15 {strides = array<i32>} : memref<1x1x32xf32, #tpu.memory_space<vmem>>, vector<1x1x32xf32>,
    } else {
    }
    return
  }
  func.func @transform_0(%arg0: i32, %arg1: i32) -> (i32, i32, i32) {
    %c0_i32 = arith.constant 0 : i32
    %c0_i32_0 = arith.constant 0 : i32
    return %arg0, %c0_i32, %arg1 : i32, i32, i32
  }
  func.func @transform_1(%arg0: i32, %arg1: i32) -> (i32, i32, i32) {
    %c0_i32 = arith.constant 0 : i32
    %c0_i32_0 = arith.constant 0 : i32
    return %arg0, %arg1, %c0_i32 : i32, i32, i32
  }
  func.func @transform_2(%arg0: i32, %arg1: i32) -> (i32, i32, i32) {
    %c0_i32 = arith.constant 0 : i32
    %c0_i32_0 = arith.constant 0 : i32
    %c0_i32_1 = arith.constant 0 : i32
    return %arg0, %c0_i32, %c0_i32_0 : i32, i32, i32
  }
  func.func @transform_3(%arg0: i32, %arg1: i32) -> (i32, i32, i32) {
    %c0_i32 = arith.constant 0 : i32
    %c0_i32_0 = arith.constant 0 : i32
    %c0_i32_1 = arith.constant 0 : i32
    return %arg0, %c0_i32, %c0_i32_0 : i32, i32, i32
  }
}

</mosaic_0001>

<llo_original>
// kernel: tpu_custom_call.1
$region0: #{tpu_custom_call.1}
  #allocation0 [shape = 'u32[]', space=smem, size = 0x4, offset = 0x4, fixed_abs, tag = 'smem constant byte address 0x4 - core index']
  #allocation1 [shape = 'u32[144,128]{1,0:T(1,128)}', space=vmem, size = 0x12000, scoped, tag = 'internal scratch']
  #allocation2 [shape = 'f32[1,1,32]{2,1,0:T(1,128)}', space=vmem, size = 0x200, scoped, tag = 'scratch operand']
  %s0 = inlined_call_operand.vmem [shape: f32[2,1,8], index: 0, kind: input, shape index: {}]
  %s1 = inlined_call_operand.hbm [shape: f32[2,8,32], index: 1, kind: input, shape index: {}]
  %s2 = inlined_call_operand.vmem [shape: f32[2,1,1], index: 2, kind: input, shape index: {}]
  %s3 = inlined_call_operand.hbm [shape: f32[2,1,32], index: 3, kind: output, shape index: {}]
  %s4 = sld [smem:[#allocation0]]
  $region57: #{tpu_custom_call.1} parent=0
    _
  %s6 = ssub.s32 1, %s4
  %s7 = scalar_select 0, %s6, %s4
  $region1: #{tpu_custom_call.1} parent=0
    #allocation3 [shape = 'u8[8192]{0}', space=vmem, size = 0x2000, scoped, tag = 'input window, operand 1']
    #allocation4 [shape = 's32[2]{0}', space=sflag, size = 0x8, scoped, tag = 'scoped memory for tpu_custom_call.1']
    #allocation5 [shape = 's32[2]{0}', space=sflag, size = 0x8, scoped, tag = 'scoped memory for tpu_custom_call.1']
    #allocation6 [shape = 'u8[1024]{0}', space=vmem, size = 0x400, scoped, tag = 'output window, operand 0']
    %8 = vsyncpa [#allocation4], 0
    %s9 = scalar_lea.sflag [#allocation4], 1
    %10 = vsyncpa %s9, 0
    %11 = vsyncpa [#allocation5], 0
    %s12 = scalar_lea.sflag [#allocation5], 1
    %13 = vsyncpa %s12, 0
    loop: start=0, step=1, limit=4
    $region2: #{tpu_custom_call.1} parent=1 // loop_pre_header
      _
    $region3: #{tpu_custom_call.1} parent=1 // loop_header
      %s15 = sphi 0, %s19
      %p16 = scmp.ge.s32.totalorder %s15, 4
      %s22 = sphi 0, %s34
      %s23 = sphi 0, %s30
      %s24 = sphi 0, %s22
      %s25 = sphi 0, %s23
      %s26 = sphi 0, %s24
      %s27 = sphi 0, %s25
      %s39 = sphi 0, %s41
      %s42 = sphi 0, %s39
      %s43 = sphi 0, %s42
      %s59 = sphi 0, %s43
      %s67 = sphi 0, %s69
      %s70 = sphi 0, %s67
      %s71 = sphi 0, %s70
      %s87 = sphi 0, %s71
      %s93 = sphi 0, %s95
      %s96 = sphi 0, %s93
      %s97 = sphi 0, %s96
      %s113 = sphi 0, %s97
      %s119 = sphi 0, %s121
      %s122 = sphi 0, %s119
      %s123 = sphi 0, %s122
      %s139 = sphi 0, %s123
    $region4: #{tpu_custom_call.1} parent=1 // loop_header_branch
      %18 = sbr.rel (%p16) target = $region8
    $region5: #{tpu_custom_call.1} parent=1 // loop_body
      %s20 = ssub.s32 %s15, 1
      %s21 = ssub.s32 %s15, 2
      %s28 = sadd.s32 1, %s23
      %p29 = scmp.ge.s32.totalorder %s28, 1
      %s30 = scalar_select %p29, 0, %s28
      %s31 = sadd.s32 1, %s22
      %s32 = scalar_select %p29, %s31, %s22
      %p33 = scmp.ge.s32.totalorder %s32, 2
      %s34 = scalar_select %p33, 0, %s32
      %s35 = ssub.s32 %s22, %s34
      %s36 = ssub.s32 %s23, %s30
      %s37 = sor.u32 %s35, %s36
      %p38 = scmp.eq.s32.totalorder %s37, 0
      %s40 = sadd.s32 %s39, 1
      %s41 = scalar_select %p38, %s39, %s40
      %p44 = pneg %p38
      %p45 = scmp.eq.s32.totalorder %s15, 1
      %p46 = por %p44, %p45
      %p47 = scmp.ne.s32.totalorder %s39, %s42
      %p48 = scmp.eq.s32.totalorder %s15, 0
      %p49 = por %p47, %p48
      %p50 = scmp.ne.s32.totalorder %s39, %s42
      %p51 = scmp.eq.s32.totalorder %s20, 1
      %p52 = por %p50, %p51
      %p53 = scmp.ne.s32.totalorder %s42, %s43
      %p54 = scmp.eq.s32.totalorder %s20, 0
      %p55 = por %p53, %p54
      %p56 = scmp.ne.s32.totalorder %s42, %s43
      %p57 = scmp.eq.s32.totalorder %s21, 1
      %p58 = por %p56, %p57
      %p60 = scmp.ne.s32.totalorder %s43, %s59
      %p61 = scmp.eq.s32.totalorder %s21, 0
      %p62 = por %p60, %p61
      %s63 = ssub.s32 %s22, %s34
      %s64 = ssub.s32 %s23, %s30
      %s65 = sor.u32 %s63, %s64
      %p66 = scmp.eq.s32.totalorder %s65, 0
      %s68 = sadd.s32 %s67, 1
      %s69 = scalar_select %p66, %s67, %s68
      %p72 = pneg %p66
      %p73 = scmp.eq.s32.totalorder %s15, 1
      %p74 = por %p72, %p73
      %p75 = scmp.ne.s32.totalorder %s67, %s70
      %p76 = scmp.eq.s32.totalorder %s15, 0
      %p77 = por %p75, %p76
      %p78 = scmp.ne.s32.totalorder %s67, %s70
      %p79 = scmp.eq.s32.totalorder %s20, 1
      %p80 = por %p78, %p79
      %p81 = scmp.ne.s32.totalorder %s70, %s71
      %p82 = scmp.eq.s32.totalorder %s20, 0
      %p83 = por %p81, %p82
      %p84 = scmp.ne.s32.totalorder %s70, %s71
      %p85 = scmp.eq.s32.totalorder %s21, 1
      %p86 = por %p84, %p85
      %p88 = scmp.ne.s32.totalorder %s71, %s87
      %p89 = scmp.eq.s32.totalorder %s21, 0
      %p90 = por %p88, %p89
      %s91 = ssub.s32 %s22, %s34
      %p92 = scmp.eq.s32.totalorder %s91, 0
      %s94 = sadd.s32 %s93, 1
      %s95 = scalar_select %p92, %s93, %s94
      %p98 = pneg %p92
      %p99 = scmp.eq.s32.totalorder %s15, 1
      %p100 = por %p98, %p99
      %p101 = scmp.ne.s32.totalorder %s93, %s96
      %p102 = scmp.eq.s32.totalorder %s15, 0
      %p103 = por %p101, %p102
      %p104 = scmp.ne.s32.totalorder %s93, %s96
      %p105 = scmp.eq.s32.totalorder %s20, 1
      %p106 = por %p104, %p105
      %p107 = scmp.ne.s32.totalorder %s96, %s97
      %p108 = scmp.eq.s32.totalorder %s20, 0
      %p109 = por %p107, %p108
      %p110 = scmp.ne.s32.totalorder %s96, %s97
      %p111 = scmp.eq.s32.totalorder %s21, 1
      %p112 = por %p110, %p111
      %p114 = scmp.ne.s32.totalorder %s97, %s113
      %p115 = scmp.eq.s32.totalorder %s21, 0
      %p116 = por %p114, %p115
      %s117 = ssub.s32 %s22, %s34
      %p118 = scmp.eq.s32.totalorder %s117, 0
      %s120 = sadd.s32 %s119, 1
      %s121 = scalar_select %p118, %s119, %s120
      %p124 = pneg %p118
      %p125 = scmp.eq.s32.totalorder %s15, 1
      %p126 = por %p124, %p125
      %p127 = scmp.ne.s32.totalorder %s119, %s122
      %p128 = scmp.eq.s32.totalorder %s15, 0
      %p129 = por %p127, %p128
      %p130 = scmp.ne.s32.totalorder %s119, %s122
      %p131 = scmp.eq.s32.totalorder %s20, 1
      %p132 = por %p130, %p131
      %p133 = scmp.ne.s32.totalorder %s122, %s123
      %p134 = scmp.eq.s32.totalorder %s20, 0
      %p135 = por %p133, %p134
      %p136 = scmp.ne.s32.totalorder %s122, %s123
      %p137 = scmp.eq.s32.totalorder %s21, 1
      %p138 = por %p136, %p137
      %p140 = scmp.ne.s32.totalorder %s123, %s139
      %p141 = scmp.eq.s32.totalorder %s21, 0
      %p142 = por %p140, %p141
      %p143 = scmp.le.s32.totalorder 1, %s15
      %p144 = scmp.lt.s32.totalorder %s15, 3
      %p145 = pnand %p143, %p144
      %p146 = pneg %p145
      // Predicated region
      $region9: #{tpu_custom_call.1} parent=5 // pred_check
        _
      $region10: #{tpu_custom_call.1} parent=5 // pred_check_branch
        %148 = sbr.rel (%p145) target = $region12
      $region11: #{tpu_custom_call.1} parent=5 // pred_region
        %s149 = ssub.s32 %s15, 1
      $region12: #{tpu_custom_call.1} parent=5 // pred_fallthru
        _
      %p150 = scmp.lt.s32.totalorder %s15, 2
      // Predicated region
      $region13: #{tpu_custom_call.1} parent=5 // pred_check
        %p151 = pneg %p150
      $region14: #{tpu_custom_call.1} parent=5 // pred_check_branch
        %153 = sbr.rel (%p151) target = $region16
      $region15: #{tpu_custom_call.1} parent=5 // pred_region
        // Predicated region
        $region17: #{tpu_custom_call.1} parent=15 // pred_check
          %p154 = pneg %p49
        $region18: #{tpu_custom_call.1} parent=15 // pred_check_branch
          %156 = sbr.rel (%p154) target = $region20
        $region19: #{tpu_custom_call.1} parent=15 // pred_region
          %p157 = scmp.lt.s32.totalorder %s22, 1
          %s158 = scalar_select %p157, %s22, 1
          %p159 = scmp.lt.s32.totalorder %s23, 0
          %s160 = scalar_select %p159, %s23, 0
          %s161 = sadd.s32 %s160, %s158
          %s162 = scalar_lea.vmem %s0, %s161
        $region20: #{tpu_custom_call.1} parent=15 // pred_fallthru
          _
        // Predicated region
        $region21: #{tpu_custom_call.1} parent=15 // pred_check
          %p163 = pneg %p77
        $region22: #{tpu_custom_call.1} parent=15 // pred_check_branch
          %165 = sbr.rel (%p163) target = $region24
        $region23: #{tpu_custom_call.1} parent=15 // pred_region
          %s166 = sand.u32 %s67, 1
          %s167 = scalar_lea.sflag [#allocation4], %s166
          %s168 = sand.u32 %s67, 1
          %s169 = smul.addr %s168, 8
          %s170 = scalar_lea.vmem [#allocation3], %s169
          %s172 = ssub.s32 128, 128
          %173 = vsyncadd %s167, %s172
          %s174 = sadd.s32 %s23, %s22
          %s175 = smul.addr %s174, 128
          %s176 = scalar_lea.hbm %s1, %s175
          %s178 = sshll.u32 %s170, 4
          %s179 = int_to_ptr.vmem [resolvable:$true] %s178
          %181 = dma.hbm_to_vmem [thread:$0]  %s176, 128, %s179, %s167
        $region24: #{tpu_custom_call.1} parent=15 // pred_fallthru
          _
        // Predicated region
        $region25: #{tpu_custom_call.1} parent=15 // pred_check
          %p182 = pneg %p103
        $region26: #{tpu_custom_call.1} parent=15 // pred_check_branch
          %184 = sbr.rel (%p182) target = $region28
        $region27: #{tpu_custom_call.1} parent=15 // pred_region
          %p185 = scmp.lt.s32.totalorder %s22, 1
          %s186 = scalar_select %p185, %s22, 1
          %s187 = scalar_lea.vmem %s2, %s186
        $region28: #{tpu_custom_call.1} parent=15 // pred_fallthru
          _
      $region16: #{tpu_custom_call.1} parent=5 // pred_fallthru
        _
      %p188 = scmp.le.s32.totalorder 1, %s15
      %p189 = scmp.lt.s32.totalorder %s15, 3
      %p190 = pnand %p188, %p189
      %p191 = pneg %p190
      // Predicated region
      $region29: #{tpu_custom_call.1} parent=5 // pred_check
        _
      $region30: #{tpu_custom_call.1} parent=5 // pred_check_branch
        %193 = sbr.rel (%p190) target = $region32
      $region31: #{tpu_custom_call.1} parent=5 // pred_region
        %s194 = ssub.s32 %s15, 1
        %s195 = sand.u32 %s70, 1
        %s196 = scalar_lea.sflag [#allocation4], %s195
        %s197 = sand.u32 %s70, 1
        %s198 = smul.addr %s197, 8
        %s199 = scalar_lea.vmem [#allocation3], %s198
        // Predicated region
        $region33: #{tpu_custom_call.1} parent=31 // pred_check
          %p200 = pneg %p83
        $region34: #{tpu_custom_call.1} parent=31 // pred_check_branch
          %202 = sbr.rel (%p200) target = $region36
        $region35: #{tpu_custom_call.1} parent=31 // pred_region
          %203 = dma.done %s196, 128
        $region36: #{tpu_custom_call.1} parent=31 // pred_fallthru
          _
        %p204 = scmp.lt.s32.totalorder %s24, 1
        %s205 = scalar_select %p204, %s24, 1
        %p206 = scmp.lt.s32.totalorder %s25, 0
        %s207 = scalar_select %p206, %s25, 0
        %s208 = sadd.s32 %s207, %s205
        %s209 = scalar_lea.vmem %s0, %s208
        %p210 = pneg %p55
        %p211 = pneg %p52
        %s212 = sand.u32 %s70, 1
        %s213 = scalar_lea.sflag [#allocation4], %s212
        %s214 = sand.u32 %s70, 1
        %s215 = smul.addr %s214, 8
        %s216 = scalar_lea.vmem [#allocation3], %s215
        %p217 = pneg %p83
        %p218 = pneg %p80
        %p219 = scmp.lt.s32.totalorder %s24, 1
        %s220 = scalar_select %p219, %s24, 1
        %s221 = scalar_lea.vmem %s2, %s220
        %p222 = pneg %p109
        %p223 = pneg %p106
        %p224 = pneg %p135
        %p225 = pneg %p132
        %s226 = sand.u32 %s122, 1
        %s227 = scalar_lea.sflag [#allocation5], %s226
        %s228 = sand.u32 %s122, 1
        %s229 = scalar_lea.vmem [#allocation6], %s228
        %p230 = scmp.lt.s32.totalorder %s24, 1
        %s231 = scalar_select %p230, %s24, 1
        %p232 = scmp.lt.s32.totalorder %s25, 0
        %s233 = scalar_select %p232, %s25, 0
        %s234 = sadd.s32 %s233, %s231
        %s235 = scalar_lea.vmem %s0, %s234
        %p236 = scmp.lt.s32.totalorder %s24, 1
        %s237 = scalar_select %p236, %s24, 1
        %s238 = scalar_lea.vmem %s2, %s237
        %p239 = scmp.eq.s32.totalorder %s25, 0
        // Predicated region
        $region37: #{tpu_custom_call.1} parent=31 // pred_check
          %p240 = pneg %p239
        $region38: #{tpu_custom_call.1} parent=31 // pred_check_branch
          %242 = sbr.rel (%p240) target = $region40
        $region39: #{tpu_custom_call.1} parent=31 // pred_region
          %vm243 = vcmask 253952
          %244 = vst.msk [vmem:[#allocation2] sm:$0x1] %vm243, 0.0
        $region40: #{tpu_custom_call.1} parent=31 // pred_fallthru
          _
        %v245 = vld [vmem:[%s235] sm:$0x1]
        %v246 = vld [vmem:[%s199] sm:$0xff]
        %v247 = vld [vmem:[#allocation2] sm:$0x1]
        %vm248 = vcmask 64512
        %v250 = vsel %vm248, %v245, 0
        %252 = vmatprep.subr.mxu0 0.0
        %253 = vmatpush1.msra.mxu0 %v246
        %254 = vmatprep.subr.mxu0 0.0
        %255 = vmatpush1.msra.mxu0 0.0
        %256 = vmatprep.subr.mxu0 0.0
        %257 = vmatpush1.msra.mxu0 0.0
        %258 = vmatprep.subr.mxu0 0.0
        %259 = vmatpush1.msra.mxu0 0.0
        %260 = vmatprep.subr.mxu0 0.0
        %261 = vmatpush1.msra.mxu0 0.0
        %262 = vmatprep.subr.mxu0 0.0
        %263 = vmatpush1.msra.mxu0 0.0
        %264 = vmatprep.subr.mxu0 0.0
        %265 = vmatpush1.msra.mxu0 0.0
        %266 = vmatprep.subr.mxu0 0.0
        %267 = vmatpush1.msra.mxu0 0.0
        %268 = vmatprep.subr.mxu0 0.0
        %269 = vmatpush1.msra.mxu0 0.0
        %270 = vmatprep.subr.mxu0 0.0
        %271 = vmatpush1.msra.mxu0 0.0
        %272 = vmatprep.subr.mxu0 0.0
        %273 = vmatpush1.msra.mxu0 0.0
        %274 = vmatprep.subr.mxu0 0.0
        %275 = vmatpush1.msra.mxu0 0.0
        %276 = vmatprep.subr.mxu0 0.0
        %277 = vmatpush1.msra.mxu0 0.0
        %278 = vmatprep.subr.mxu0 0.0
        %279 = vmatpush1.msra.mxu0 0.0
        %280 = vmatprep.subr.mxu0 0.0
        %281 = vmatpush1.msra.mxu0 0.0
        %282 = vmatprep.subr.mxu0 0.0
        %283 = vmatpush1.msra.mxu0 0.0
        %284 = vmatprep.subr.mxu0 0.0
        %285 = vmatpush1.msra.mxu0 0.0
        %286 = vmatprep.subr.mxu0 0.0
        %287 = vmatpush1.msra.mxu0 0.0
        %288 = vmatprep.subr.mxu0 0.0
        %289 = vmatpush1.msra.mxu0 0.0
        %290 = vmatprep.subr.mxu0 0.0
        %291 = vmatpush1.msra.mxu0 0.0
        %292 = vmatprep.subr.mxu0 0.0
        %293 = vmatpush1.msra.mxu0 0.0
        %294 = vmatprep.subr.mxu0 0.0
        %295 = vmatpush1.msra.mxu0 0.0
        %296 = vmatprep.subr.mxu0 0.0
        %297 = vmatpush1.msra.mxu0 0.0
        %298 = vmatprep.subr.mxu0 0.0
        %299 = vmatpush1.msra.mxu0 0.0
        %300 = vmatprep.subr.mxu0 0.0
        %301 = vmatpush1.msra.mxu0 0.0
        %302 = vmatprep.subr.mxu0 0.0
        %303 = vmatpush1.msra.mxu0 0.0
        %304 = vmatprep.subr.mxu0 0.0
        %305 = vmatpush1.msra.mxu0 0.0
        %306 = vmatprep.subr.mxu0 0.0
        %307 = vmatpush1.msra.mxu0 0.0
        %308 = vmatprep.subr.mxu0 0.0
        %309 = vmatpush1.msra.mxu0 0.0
        %310 = vmatprep.subr.mxu0 0.0
        %311 = vmatpush1.msra.mxu0 0.0
        %312 = vmatprep.subr.mxu0 0.0
        %313 = vmatpush1.msra.mxu0 0.0
        %314 = vmatprep.subr.mxu0 0.0
        %315 = vmatpush1.msra.mxu0 0.0
        %316 = vmatprep.mubr.f32.mxu0 0.0
        %317 = vmatmul.mubr.f32.gmra.mrb[0].mxu0 %v250
        %v318 = vpop.f32.mrb[0].mxu0
        %v319 = vadd.f32 0.0, %v318
        %v320 = vpop.f32.mrb[0].mxu0
        %321 = vdwg.mxu0
        %v322 = vadd.f32 %v247, %v319
        %vm323 = vcmask 253952
        %324 = vst.msk [vmem:[#allocation2] sm:$0x1] %vm323, %v322
        // Predicated region
        $region41: #{tpu_custom_call.1} parent=31 // pred_check
          %p325 = pneg %p239
        $region42: #{tpu_custom_call.1} parent=31 // pred_check_branch
          %327 = sbr.rel (%p325) target = $region44
        $region43: #{tpu_custom_call.1} parent=31 // pred_region
          %v328 = vld [vmem:[#allocation2] sm:$0x1]
          %v329 = vld [vmem:[%s238] sm:$0x1]
          %331 = vset.pattern.permute.xlu0 0
          %332 = vperm.xlu0 %331, %v329
          %v333 = vpop.permute.xlu0 %332
          %v335 = vlaneseq
          %v336 = vshrl.u32 %v335, 7
          %v337 = vsub.s32 0, %v336
          %v338 = vrot.slane %v333, %v337
          %v339 = vmul.f32 %v328, %v338
          %340 = vst.msk [vmem:[%s229] sm:$0x1] %vm323, %v339
        $region44: #{tpu_custom_call.1} parent=31 // pred_fallthru
          _
        %s341 = sand.u32 %s122, 1
        %s342 = scalar_lea.sflag [#allocation5], %s341
        %s343 = sand.u32 %s122, 1
        %s344 = scalar_lea.vmem [#allocation6], %s343
        // Predicated region
        $region45: #{tpu_custom_call.1} parent=31 // pred_check
          %p345 = pneg %p132
        $region46: #{tpu_custom_call.1} parent=31 // pred_check_branch
          %347 = sbr.rel (%p345) target = $region48
        $region47: #{tpu_custom_call.1} parent=31 // pred_region
          %s349 = ssub.s32 16, 16
          %350 = vsyncadd %s342, %s349
          %s351 = smul.addr %s24, 16
          %s352 = scalar_lea.hbm %s3, %s351
          %s354 = sshll.u32 %s344, 4
          %s355 = int_to_ptr.vmem [resolvable:$true] %s354
          %357 = dma.vmem_to_hbm [thread:$0]  %s355, 16, %s352, %s342
        $region48: #{tpu_custom_call.1} parent=31 // pred_fallthru
          _
      $region32: #{tpu_custom_call.1} parent=5 // pred_fallthru
        _
      %p358 = scmp.le.s32.totalorder 2, %s15
      // Predicated region
      $region49: #{tpu_custom_call.1} parent=5 // pred_check
        %p359 = pneg %p358
      $region50: #{tpu_custom_call.1} parent=5 // pred_check_branch
        %361 = sbr.rel (%p359) target = $region52
      $region51: #{tpu_custom_call.1} parent=5 // pred_region
        %s362 = ssub.s32 %s15, 2
        // Predicated region
        $region53: #{tpu_custom_call.1} parent=51 // pred_check
          %p363 = pneg %p138
        $region54: #{tpu_custom_call.1} parent=51 // pred_check_branch
          %365 = sbr.rel (%p363) target = $region56
        $region55: #{tpu_custom_call.1} parent=51 // pred_region
          %s366 = sand.u32 %s123, 1
          %s367 = scalar_lea.sflag [#allocation5], %s366
          %s368 = sand.u32 %s123, 1
          %s369 = scalar_lea.vmem [#allocation6], %s368
          %370 = dma.done %s367, 16
        $region56: #{tpu_custom_call.1} parent=51 // pred_fallthru
          _
      $region52: #{tpu_custom_call.1} parent=5 // pred_fallthru
        _
    $region6: #{tpu_custom_call.1} parent=1 // loop_footer
      %s19 = sadd.s32 1, %s15
    $region7: #{tpu_custom_call.1} parent=1 // loop_footer_branch
      %14 = sbr.rel target = $region3
    $region8: #{tpu_custom_call.1} parent=1 // loop_exit
      _
    %371 = vsyncpa [#allocation4], 1
    %s372 = scalar_lea.sflag [#allocation4], 1
    %373 = vsyncpa %s372, 1
    %374 = vsyncpa [#allocation5], 1
    %s375 = scalar_lea.sflag [#allocation5], 1
    %376 = vsyncpa %s375, 1

</llo_original>
